<compile_context>
chip_gen: v7x
topology: tpu7x:2x2x1
jax: 0.10.0
libtpu: 0.0.40
codegen_flags: <defaults>
</compile_context>

<pallas_src>
import functools

import jax
import jax.numpy as jnp
from jax.experimental import pallas as pl
from jax.experimental.pallas import tpu as pltpu


def _round_up(x, m):
    return ((x + m - 1) // m) * m


def _vmem_policy():
    """Generation-aware VMEM sizing: v5e/v6e have 128 MiB, v7x only 64 MiB/TC."""
    try:
        vmem_bytes = int(pltpu.get_tpu_info().vmem_capacity_bytes)
    except Exception:
        vmem_bytes = 64 * 1024 * 1024  # conservative fallback (assume v7x)
    if vmem_bytes >= 128 * 1024 * 1024:  # v5e / v6e
        return dict(budget_bytes=64 << 20, vmem_limit_bytes=96 << 20, cap_cols=16384)
    # v7x: 64 MiB per TensorCore -> keep conservative headroom.
    return dict(budget_bytes=32 << 20, vmem_limit_bytes=48 << 20, cap_cols=8192)


def _pick_tile_hw(hw, c_in, c_out, n, *, elem_bytes, budget_bytes, cap_cols):
    """Balanced H*W tile (multiple of 128) fitting VMEM, with >=2 grid steps."""
    hw_aligned = _round_up(hw, 128)
    # Double-buffered input + output columns per grid step.
    per_col_bytes = 2 * elem_bytes * (c_in + c_out)
    max_cols = max(128, (budget_bytes // per_col_bytes) // 128 * 128)
    cap = min(cap_cols, max_cols)
    # Balance tiles instead of padding hw up to the cap: waste < 128 cols/tile.
    n_tiles = pl.cdiv(hw_aligned, cap)
    t_hw = _round_up(pl.cdiv(hw, n_tiles), 128)
    # v7x has 2 TensorCores sharing the 'parallel' grid: ensure >= 2 steps.
    while n * pl.cdiv(hw, t_hw) < 2 and t_hw > 128:
        t_hw = _round_up(pl.cdiv(t_hw, 2), 128)
    return int(t_hw)


def _conv1x1_kernel(x_ref, w_ref, b_ref, o_ref):
    # x_ref: (1, C_in, t_hw) bf16   w_ref: (C_out, C_in) bf16
    # b_ref: (C_out, 1) f32         o_ref: (1, C_out, t_hw) bf16
    y = jnp.dot(w_ref[...], x_ref[0], preferred_element_type=jnp.float32)
    o_ref[0] = (y + b_ref[...]).astype(o_ref.dtype)


@functools.partial(jax.jit, static_argnames=("t_hw", "vmem_limit_bytes"))
def _conv1x1_nchw(x3, w, b2, *, t_hw, vmem_limit_bytes):
    """x3: (N, C_in, HW); w: (C_out, C_in); b2: (C_out, 1) -> (N, C_out, HW)."""
    n, c_in, hw = x3.shape
    c_out = w.shape[0]
    grid = (n, pl.cdiv(hw, t_hw))  # partial tail block handled by Pallas masking

    elem = jnp.dtype(x3.dtype).itemsize
    flops = 2 * n * hw * c_in * c_out
    bytes_accessed = (elem * n * c_in * hw          # read X
                      + elem * c_in * c_out         # read W
                      + 4 * c_out                   # read bias
                      + elem * n * c_out * hw)      # write Y

    # TODO(synk): if profiling on v5e/v6e shows exposed DMA at step boundaries,
    # add pipeline_mode=pl.Buffered(3) to the activation in_spec (skip on v7x).
    return pl.pallas_call(
        _conv1x1_kernel,
        out_shape=jax.ShapeDtypeStruct((n, c_out, hw), x3.dtype),
        grid_spec=pltpu.PrefetchScalarGridSpec(
            num_scalar_prefetch=0,
            grid=grid,
            in_specs=[
                # Activation tile: batch b, full C_in, H*W tile j.
                pl.BlockSpec((1, c_in, t_hw), lambda b, j: (b, 0, j)),
                # Weight: full array, constant block index -> resident in VMEM.
                pl.BlockSpec((c_out, c_in), lambda b, j: (0, 0)),
                # Bias: full array, constant block index.
                pl.BlockSpec((c_out, 1), lambda b, j: (0, 0)),
            ],
            out_specs=pl.BlockSpec((1, c_out, t_hw), lambda b, j: (b, 0, j)),
        ),
        compiler_params=pltpu.CompilerParams(
            dimension_semantics=("parallel", "parallel"),
            vmem_limit_bytes=vmem_limit_bytes,
        ),
        cost_estimate=pl.CostEstimate(
            flops=flops, transcendentals=0, bytes_accessed=bytes_accessed
        ),
    )(x3, w, b2)


def simple_fpn_forward(x_nchw, weight, bias, *, compute_dtype=jnp.bfloat16):
    """Mirror SimpleFPN.forward: return [conv1x1(x)].

    x_nchw: (N, C_in, H, W)
    weight: (C_out, C_in)   -- squeezed 1x1 conv kernel (C_out, C_in, 1, 1)
    bias:   (C_out,)

    Activations/weights/output are carried in `compute_dtype` (bf16 by default)
    to halve HBM traffic; accumulation stays in f32 inside the kernel.
    """
    n, c_in, h, w = x_nchw.shape
    c_out = weight.shape[0]
    hw = h * w

    policy = _vmem_policy()
    elem_bytes = jnp.dtype(compute_dtype).itemsize
    t_hw = _pick_tile_hw(hw, c_in, c_out, n,
                         elem_bytes=elem_bytes,
                         budget_bytes=policy["budget_bytes"],
                         cap_cols=policy["cap_cols"])

    # NCHW -> (N, C_in, H*W): contiguous reshape, no transpose / extra HBM pass.
    # (In a real pipeline the activation would already arrive in bf16.)
    x3 = x_nchw.reshape(n, c_in, hw).astype(compute_dtype)
    w2 = weight.astype(compute_dtype)
    b2 = bias.reshape(c_out, 1).astype(jnp.float32)

    y3 = _conv1x1_nchw(x3, w2, b2, t_hw=t_hw,
                       vmem_limit_bytes=policy["vmem_limit_bytes"])
    return [y3.reshape(n, c_out, h, w)]


if __name__ == "__main__":
    # Small shapes consistent with the module: a 1x1 conv with
    # in_channels == out_channels.
    C = 128
    key = jax.random.PRNGKey(0)
    kx, kw, kb = jax.random.split(key, 3)

    # Deterministic "Conv2d(C, C, kernel_size=1)" parameters.
    weight = jax.random.normal(kw, (C, C), dtype=jnp.float32) * 0.05
    bias = jax.random.normal(kb, (C,), dtype=jnp.float32) * 0.05

    def check(n, h, w):
        x = jax.random.normal(kx, (n, C, h, w), dtype=jnp.float32)
        outs = simple_fpn_forward(x, weight, bias)
        y = jax.block_until_ready(outs[0])
        assert y.shape == (n, C, h, w)
        ref = jnp.einsum("nchw,oc->nohw", x, weight) + bias[None, :, None, None]
        # bf16 compute -> ~3 significant digits; loosen tolerance accordingly.
        assert jnp.allclose(y.astype(jnp.float32), ref, atol=5e-2, rtol=5e-2)

    check(2, 16, 16)   # HW multiple of 128: full tiles
    check(2, 9, 9)     # HW = 81: partial (masked) trailing H*W block, no jnp.pad

    print("KERNEL_OK")
</pallas_src>

<mosaic_0001>
module attributes {stable_mosaic.version = 11 : i64} {
  func.func @_conv1x1_kernel(%arg0: i32, %arg1: i32, %arg2: memref<1x128x256xbf16, #tpu.memory_space<vmem>>, %arg3: memref<128x128xbf16, #tpu.memory_space<vmem>>, %arg4: memref<128x1xf32, #tpu.memory_space<vmem>>, %arg5: memref<1x128x256xbf16, #tpu.memory_space<vmem>>) attributes {dimension_semantics = [#tpu.dimension_semantics<parallel>, #tpu.dimension_semantics<parallel>], iteration_bounds = array<i64: 2, 1>, scalar_prefetch = 0 : i64, scratch_operands = 0 : i64, tpu.core_type = #tpu.core_type<tc>, window_params = [{transform_indices = @transform_0, window_bounds = array<i64: 1, 128, 256>}, {pipeline_mode = #tpu.pipeline_mode<synchronous>, transform_indices = @transform_1, window_bounds = array<i64: 128, 128>}, {pipeline_mode = #tpu.pipeline_mode<synchronous>, transform_indices = @transform_2, window_bounds = array<i64: 128, 1>}, {transform_indices = @transform_3, window_bounds = array<i64: 1, 128, 256>}]} {
    %c0 = arith.constant 0 : index
    %c0_0 = arith.constant 0 : index
    %0 = vector.load %arg3[%c0, %c0_0] : memref<128x128xbf16, #tpu.memory_space<vmem>>, vector<128x128xbf16>
    %c0_1 = arith.constant 0 : index
    %c0_2 = arith.constant 0 : index
    %c0_3 = arith.constant 0 : index
    %1 = vector.load %arg2[%c0_1, %c0_2, %c0_3] : memref<1x128x256xbf16, #tpu.memory_space<vmem>>, vector<1x128x256xbf16>
    %2 = vector.shape_cast %1 : vector<1x128x256xbf16> to vector<128x256xbf16>
    %cst = arith.constant dense<0.000000e+00> : vector<128x256xf32>
    %3 = tpu.matmul %0, %2, %cst {dimension_numbers = #tpu.dot_dimension_numbers<[1], [0], [0], [1], [0, 0, 1, 1], [], []>} : vector<128x128xbf16>, vector<128x256xbf16>, vector<128x256xf32> -> vector<128x256xf32>
    %c0_4 = arith.constant 0 : index
    %c0_5 = arith.constant 0 : index
    %4 = vector.load %arg4[%c0_4, %c0_5] : memref<128x1xf32, #tpu.memory_space<vmem>>, vector<128x1xf32>
    %5 = vector.broadcast %4 : vector<128x1xf32> to vector<128x256xf32>
    %6 = arith.addf %3, %5 : vector<128x256xf32>
    %7 = arith.truncf %6 : vector<128x256xf32> to vector<128x256xbf16>
    %c0_6 = arith.constant 0 : index
    %c0_7 = arith.constant 0 : index
    %c0_8 = arith.constant 0 : index
    %8 = vector.load %arg5[%c0_6, %c0_7, %c0_8] : memref<1x128x256xbf16, #tpu.memory_space<vmem>>, vector<1x128x256xbf16>
    %9 = vector.shape_cast %8 : vector<1x128x256xbf16> to vector<128x256xbf16>
    %10 = vector.shape_cast %7 : vector<128x256xbf16> to vector<1x128x256xbf16>
    tpu.vector_store %arg5[%c0_6, %c0_7, %c0_8], %10 {strides = array<i32>} : memref<1x128x256xbf16, #tpu.memory_space<vmem>>, vector<1x128x256xbf16>,
    return
  }
  func.func @transform_0(%arg0: i32, %arg1: i32) -> (i32, i32, i32) {
    %c0_i32 = arith.constant 0 : i32
    %c0_i32_0 = arith.constant 0 : i32
    return %arg0, %c0_i32, %arg1 : i32, i32, i32
  }
  func.func @transform_1(%arg0: i32, %arg1: i32) -> (i32, i32) {
    %c0_i32 = arith.constant 0 : i32
    %c0_i32_0 = arith.constant 0 : i32
    %c0_i32_1 = arith.constant 0 : i32
    return %c0_i32, %c0_i32_0 : i32, i32
  }
  func.func @transform_2(%arg0: i32, %arg1: i32) -> (i32, i32) {
    %c0_i32 = arith.constant 0 : i32
    %c0_i32_0 = arith.constant 0 : i32
    %c0_i32_1 = arith.constant 0 : i32
    return %c0_i32, %c0_i32_0 : i32, i32
  }
  func.func @transform_3(%arg0: i32, %arg1: i32) -> (i32, i32, i32) {
    %c0_i32 = arith.constant 0 : i32
    %c0_i32_0 = arith.constant 0 : i32
    return %arg0, %c0_i32, %arg1 : i32, i32, i32
  }
}

</mosaic_0001>

<llo_original>
// kernel: _conv1x1_nchw.1
$region0: #{_conv1x1_nchw.1}
  #allocation0 [shape = 'u32[]', space=smem, size = 0x4, offset = 0x4, fixed_abs, tag = 'smem constant byte address 0x4 - core index']
  #allocation1 [shape = 'u32[144,128]{1,0:T(1,128)}', space=vmem, size = 0x12000, scoped, tag = 'internal scratch']
  %s0 = inlined_call_operand.hbm [shape: bf16[2,128,256], index: 0, kind: input, shape index: {}]
  %s1 = inlined_call_operand.vmem [shape: bf16[128,128], index: 1, kind: input, shape index: {}]
  %s2 = inlined_call_operand.vmem [shape: f32[128,1], index: 2, kind: input, shape index: {}]
  %s3 = inlined_call_operand.hbm [shape: bf16[2,128,256], index: 3, kind: output, shape index: {}]
  %s4 = sld [smem:[#allocation0]]
  $region49: #{_conv1x1_nchw.1} parent=0
    _
  %s6 = ssub.s32 1, %s4
  %s7 = scalar_select 0, %s6, %s4
  $region1: #{_conv1x1_nchw.1} parent=0
    #allocation2 [shape = 'u8[131072]{0}', space=vmem, size = 0x20000, scoped, tag = 'input window, operand 0']
    #allocation3 [shape = 's32[2]{0}', space=sflag, size = 0x8, scoped, tag = 'scoped memory for _conv1x1_nchw.1']
    #allocation4 [shape = 's32[2]{0}', space=sflag, size = 0x8, scoped, tag = 'scoped memory for _conv1x1_nchw.1']
    #allocation5 [shape = 'u8[131072]{0}', space=vmem, size = 0x20000, scoped, tag = 'output window, operand 0']
    %8 = vsyncpa [#allocation3], 0
    %s9 = scalar_lea.sflag [#allocation3], 1
    %10 = vsyncpa %s9, 0
    %11 = vsyncpa [#allocation4], 0
    %s12 = scalar_lea.sflag [#allocation4], 1
    %13 = vsyncpa %s12, 0
    loop: start=0, step=1, limit=4
    $region2: #{_conv1x1_nchw.1} parent=1 // loop_pre_header
      _
    $region3: #{_conv1x1_nchw.1} parent=1 // loop_header
      %s15 = sphi 0, %s19
      %p16 = scmp.ge.s32.totalorder %s15, 4
      %s22 = sphi 0, %s34
      %s23 = sphi 0, %s30
      %s24 = sphi 0, %s22
      %s25 = sphi 0, %s23
      %s26 = sphi 0, %s24
      %s27 = sphi 0, %s25
      %s39 = sphi 0, %s41
      %s42 = sphi 0, %s39
      %s43 = sphi 0, %s42
      %s59 = sphi 0, %s43
      %s63 = sphi 0, %s63
      %s65 = sphi 0, %s63
      %s66 = sphi 0, %s65
      %s80 = sphi 0, %s66
      %s84 = sphi 0, %s84
      %s86 = sphi 0, %s84
      %s87 = sphi 0, %s86
      %s101 = sphi 0, %s87
      %s109 = sphi 0, %s111
      %s112 = sphi 0, %s109
      %s113 = sphi 0, %s112
      %s129 = sphi 0, %s113
    $region4: #{_conv1x1_nchw.1} parent=1 // loop_header_branch
      %18 = sbr.rel (%p16) target = $region8
    $region5: #{_conv1x1_nchw.1} parent=1 // loop_body
      %s20 = ssub.s32 %s15, 1
      %s21 = ssub.s32 %s15, 2
      %s28 = sadd.s32 1, %s23
      %p29 = scmp.ge.s32.totalorder %s28, 1
      %s30 = scalar_select %p29, 0, %s28
      %s31 = sadd.s32 1, %s22
      %s32 = scalar_select %p29, %s31, %s22
      %p33 = scmp.ge.s32.totalorder %s32, 2
      %s34 = scalar_select %p33, 0, %s32
      %s35 = ssub.s32 %s22, %s34
      %s36 = ssub.s32 %s23, %s30
      %s37 = sor.u32 %s35, %s36
      %p38 = scmp.eq.s32.totalorder %s37, 0
      %s40 = sadd.s32 %s39, 1
      %s41 = scalar_select %p38, %s39, %s40
      %p44 = pneg %p38
      %p45 = scmp.eq.s32.totalorder %s15, 1
      %p46 = por %p44, %p45
      %p47 = scmp.ne.s32.totalorder %s39, %s42
      %p48 = scmp.eq.s32.totalorder %s15, 0
      %p49 = por %p47, %p48
      %p50 = scmp.ne.s32.totalorder %s39, %s42
      %p51 = scmp.eq.s32.totalorder %s20, 1
      %p52 = por %p50, %p51
      %p53 = scmp.ne.s32.totalorder %s42, %s43
      %p54 = scmp.eq.s32.totalorder %s20, 0
      %p55 = por %p53, %p54
      %p56 = scmp.ne.s32.totalorder %s42, %s43
      %p57 = scmp.eq.s32.totalorder %s21, 1
      %p58 = por %p56, %p57
      %p60 = scmp.ne.s32.totalorder %s43, %s59
      %p61 = scmp.eq.s32.totalorder %s21, 0
      %p62 = por %p60, %p61
      %s64 = sadd.s32 %s63, 1
      %p67 = scmp.eq.s32.totalorder %s15, 1
      %p68 = scmp.ne.s32.totalorder %s63, %s65
      %p69 = scmp.eq.s32.totalorder %s15, 0
      %p70 = por %p68, %p69
      %p71 = scmp.ne.s32.totalorder %s63, %s65
      %p72 = scmp.eq.s32.totalorder %s20, 1
      %p73 = por %p71, %p72
      %p74 = scmp.ne.s32.totalorder %s65, %s66
      %p75 = scmp.eq.s32.totalorder %s20, 0
      %p76 = por %p74, %p75
      %p77 = scmp.ne.s32.totalorder %s65, %s66
      %p78 = scmp.eq.s32.totalorder %s21, 1
      %p79 = por %p77, %p78
      %p81 = scmp.ne.s32.totalorder %s66, %s80
      %p82 = scmp.eq.s32.totalorder %s21, 0
      %p83 = por %p81, %p82
      %s85 = sadd.s32 %s84, 1
      %p88 = scmp.eq.s32.totalorder %s15, 1
      %p89 = scmp.ne.s32.totalorder %s84, %s86
      %p90 = scmp.eq.s32.totalorder %s15, 0
      %p91 = por %p89, %p90
      %p92 = scmp.ne.s32.totalorder %s84, %s86
      %p93 = scmp.eq.s32.totalorder %s20, 1
      %p94 = por %p92, %p93
      %p95 = scmp.ne.s32.totalorder %s86, %s87
      %p96 = scmp.eq.s32.totalorder %s20, 0
      %p97 = por %p95, %p96
      %p98 = scmp.ne.s32.totalorder %s86, %s87
      %p99 = scmp.eq.s32.totalorder %s21, 1
      %p100 = por %p98, %p99
      %p102 = scmp.ne.s32.totalorder %s87, %s101
      %p103 = scmp.eq.s32.totalorder %s21, 0
      %p104 = por %p102, %p103
      %s105 = ssub.s32 %s22, %s34
      %s106 = ssub.s32 %s23, %s30
      %s107 = sor.u32 %s105, %s106
      %p108 = scmp.eq.s32.totalorder %s107, 0
      %s110 = sadd.s32 %s109, 1
      %s111 = scalar_select %p108, %s109, %s110
      %p114 = pneg %p108
      %p115 = scmp.eq.s32.totalorder %s15, 1
      %p116 = por %p114, %p115
      %p117 = scmp.ne.s32.totalorder %s109, %s112
      %p118 = scmp.eq.s32.totalorder %s15, 0
      %p119 = por %p117, %p118
      %p120 = scmp.ne.s32.totalorder %s109, %s112
      %p121 = scmp.eq.s32.totalorder %s20, 1
      %p122 = por %p120, %p121
      %p123 = scmp.ne.s32.totalorder %s112, %s113
      %p124 = scmp.eq.s32.totalorder %s20, 0
      %p125 = por %p123, %p124
      %p126 = scmp.ne.s32.totalorder %s112, %s113
      %p127 = scmp.eq.s32.totalorder %s21, 1
      %p128 = por %p126, %p127
      %p130 = scmp.ne.s32.totalorder %s113, %s129
      %p131 = scmp.eq.s32.totalorder %s21, 0
      %p132 = por %p130, %p131
      %p133 = scmp.le.s32.totalorder 1, %s15
      %p134 = scmp.lt.s32.totalorder %s15, 3
      %p135 = pnand %p133, %p134
      %p136 = pneg %p135
      // Predicated region
      $region9: #{_conv1x1_nchw.1} parent=5 // pred_check
        _
      $region10: #{_conv1x1_nchw.1} parent=5 // pred_check_branch
        %138 = sbr.rel (%p135) target = $region12
      $region11: #{_conv1x1_nchw.1} parent=5 // pred_region
        %s139 = ssub.s32 %s15, 1
        // Predicated region
        $region13: #{_conv1x1_nchw.1} parent=11 // pred_check
          %p140 = pneg %p76
        $region14: #{_conv1x1_nchw.1} parent=11 // pred_check_branch
          %142 = sbr.rel (%p140) target = $region16
        $region15: #{_conv1x1_nchw.1} parent=11 // pred_region
          _
        $region16: #{_conv1x1_nchw.1} parent=11 // pred_fallthru
          _
        // Predicated region
        $region17: #{_conv1x1_nchw.1} parent=11 // pred_check
          %p143 = pneg %p97
        $region18: #{_conv1x1_nchw.1} parent=11 // pred_check_branch
          %145 = sbr.rel (%p143) target = $region20
        $region19: #{_conv1x1_nchw.1} parent=11 // pred_region
          _
        $region20: #{_conv1x1_nchw.1} parent=11 // pred_fallthru
          _
      $region12: #{_conv1x1_nchw.1} parent=5 // pred_fallthru
        _
      %p146 = scmp.lt.s32.totalorder %s15, 2
      // Predicated region
      $region21: #{_conv1x1_nchw.1} parent=5 // pred_check
        %p147 = pneg %p146
      $region22: #{_conv1x1_nchw.1} parent=5 // pred_check_branch
        %149 = sbr.rel (%p147) target = $region24
      $region23: #{_conv1x1_nchw.1} parent=5 // pred_region
        // Predicated region
        $region25: #{_conv1x1_nchw.1} parent=23 // pred_check
          %p150 = pneg %p49
        $region26: #{_conv1x1_nchw.1} parent=23 // pred_check_branch
          %152 = sbr.rel (%p150) target = $region28
        $region27: #{_conv1x1_nchw.1} parent=23 // pred_region
          %s153 = sand.u32 %s39, 1
          %s154 = scalar_lea.sflag [#allocation3], %s153
          %s155 = sand.u32 %s39, 1
          %s156 = smul.addr %s155, 128
          %s157 = scalar_lea.vmem [#allocation2], %s156
          %s158 = smul.u32 2, %s23
          %s160 = ssub.s32 2048, 2048
          %161 = vsyncadd %s154, %s160
          %s162 = smul.addr %s22, 32
          %s163 = sadd.s32 %s158, %s162
          %s164 = smul.addr %s163, 64
          %s165 = scalar_lea.hbm %s0, %s164
          %s166 = sshll.u32 %s157, 4
          %s167 = int_to_ptr.vmem [resolvable:$true] %s166
          %172 = dma.hbm_to_vmem [thread:$0]  %s165, 2048, %s167, %s154, 128, 128, 8
        $region28: #{_conv1x1_nchw.1} parent=23 // pred_fallthru
          _
      $region24: #{_conv1x1_nchw.1} parent=5 // pred_fallthru
        _
      %p173 = scmp.le.s32.totalorder 1, %s15
      %p174 = scmp.lt.s32.totalorder %s15, 3
      %p175 = pnand %p173, %p174
      %p176 = pneg %p175
      // Predicated region
      $region29: #{_conv1x1_nchw.1} parent=5 // pred_check
        _
      $region30: #{_conv1x1_nchw.1} parent=5 // pred_check_branch
        %178 = sbr.rel (%p175) target = $region32
      $region31: #{_conv1x1_nchw.1} parent=5 // pred_region
        %s179 = ssub.s32 %s15, 1
        %s180 = sand.u32 %s42, 1
        %s181 = scalar_lea.sflag [#allocation3], %s180
        %s182 = sand.u32 %s42, 1
        %s183 = smul.addr %s182, 128
        %s184 = scalar_lea.vmem [#allocation2], %s183
        // Predicated region
        $region33: #{_conv1x1_nchw.1} parent=31 // pred_check
          %p185 = pneg %p55
        $region34: #{_conv1x1_nchw.1} parent=31 // pred_check_branch
          %187 = sbr.rel (%p185) target = $region36
        $region35: #{_conv1x1_nchw.1} parent=31 // pred_region
          %188 = dma.done %s181, 2048
        $region36: #{_conv1x1_nchw.1} parent=31 // pred_fallthru
          _
        %s189 = sand.u32 %s42, 1
        %s190 = scalar_lea.sflag [#allocation3], %s189
        %s191 = sand.u32 %s42, 1
        %s192 = smul.addr %s191, 128
        %s193 = scalar_lea.vmem [#allocation2], %s192
        %p194 = pneg %p55
        %p195 = pneg %p52
        %p196 = pneg %p76
        %p197 = pneg %p73
        %p198 = pneg %p97
        %p199 = pneg %p94
        %p200 = pneg %p125
        %p201 = pneg %p122
        %s202 = sand.u32 %s112, 1
        %s203 = scalar_lea.sflag [#allocation4], %s202
        %s204 = sand.u32 %s112, 1
        %s205 = smul.addr %s204, 128
        %s206 = scalar_lea.vmem [#allocation5], %s205
        %s207 = smul.u32 2, %s25
        %s208 = smul.u32 2, %s25
        %v210 = vld [vmem:[%s1] sm:$0xf]
        %v211 = vld [vmem:[%s1 + $0x4] sm:$0xf]
        %v212 = vld [vmem:[%s1 + $0x8] sm:$0xf]
        %v213 = vld [vmem:[%s1 + $0xc] sm:$0xf]
        %v214 = vld [vmem:[%s1 + $0x10] sm:$0xf]
        %v215 = vld [vmem:[%s1 + $0x14] sm:$0xf]
        %v216 = vld [vmem:[%s1 + $0x18] sm:$0xf]
        %v217 = vld [vmem:[%s1 + $0x1c] sm:$0xf]
        %v218 = vld [vmem:[%s1 + $0x20] sm:$0xf]
        %v219 = vld [vmem:[%s1 + $0x24] sm:$0xf]
        %v220 = vld [vmem:[%s1 + $0x28] sm:$0xf]
        %v221 = vld [vmem:[%s1 + $0x2c] sm:$0xf]
        %v222 = vld [vmem:[%s1 + $0x30] sm:$0xf]
        %v223 = vld [vmem:[%s1 + $0x34] sm:$0xf]
        %v224 = vld [vmem:[%s1 + $0x38] sm:$0xf]
        %v225 = vld [vmem:[%s1 + $0x3c] sm:$0xf]
        %v226 = vld [vmem:[%s184] sm:$0xff]
        %v227 = vld [vmem:[%s184 + $0x8] sm:$0xff]
        %v228 = vld [vmem:[%s184 + $0x10] sm:$0xff]
        %v229 = vld [vmem:[%s184 + $0x18] sm:$0xff]
        %v230 = vld [vmem:[%s184 + $0x20] sm:$0xff]
        %v231 = vld [vmem:[%s184 + $0x28] sm:$0xff]
        %v232 = vld [vmem:[%s184 + $0x30] sm:$0xff]
        %v233 = vld [vmem:[%s184 + $0x38] sm:$0xff]
        %v234 = vld [vmem:[%s184 + $0x40] sm:$0xff]
        %v235 = vld [vmem:[%s184 + $0x48] sm:$0xff]
        %v236 = vld [vmem:[%s184 + $0x50] sm:$0xff]
        %v237 = vld [vmem:[%s184 + $0x58] sm:$0xff]
        %v238 = vld [vmem:[%s184 + $0x60] sm:$0xff]
        %v239 = vld [vmem:[%s184 + $0x68] sm:$0xff]
        %v240 = vld [vmem:[%s184 + $0x70] sm:$0xff]
        %v241 = vld [vmem:[%s184 + $0x78] sm:$0xff]
        %v242 = vld [vmem:[%s2] sm:$0xff]
        %v243 = vld [vmem:[%s2 + $0x8] sm:$0xff]
        %v244 = vld [vmem:[%s2 + $0x10] sm:$0xff]
        %v245 = vld [vmem:[%s2 + $0x18] sm:$0xff]
        %v246 = vld [vmem:[%s2 + $0x20] sm:$0xff]
        %v247 = vld [vmem:[%s2 + $0x28] sm:$0xff]
        %v248 = vld [vmem:[%s2 + $0x30] sm:$0xff]
        %v249 = vld [vmem:[%s2 + $0x38] sm:$0xff]
        %v250 = vld [vmem:[%s2 + $0x40] sm:$0xff]
        %v251 = vld [vmem:[%s2 + $0x48] sm:$0xff]
        %v252 = vld [vmem:[%s2 + $0x50] sm:$0xff]
        %v253 = vld [vmem:[%s2 + $0x58] sm:$0xff]
        %v254 = vld [vmem:[%s2 + $0x60] sm:$0xff]
        %v255 = vld [vmem:[%s2 + $0x68] sm:$0xff]
        %v256 = vld [vmem:[%s2 + $0x70] sm:$0xff]
        %v257 = vld [vmem:[%s2 + $0x78] sm:$0xff]
        %259 = vset.pattern.permute.xlu0 0
        %260 = vperm.xlu0 %259, %v242
        %v261 = vpop.permute.xlu0 %260
        %264 = vset.pattern.permute.xlu0 0
        %265 = vperm.xlu0 %264, %v243
        %v266 = vpop.permute.xlu0 %265
        %269 = vset.pattern.permute.xlu0 0
        %270 = vperm.xlu0 %269, %v244
        %v271 = vpop.permute.xlu0 %270
        %274 = vset.pattern.permute.xlu0 0
        %275 = vperm.xlu0 %274, %v245
        %v276 = vpop.permute.xlu0 %275
        %279 = vset.pattern.permute.xlu0 0
        %280 = vperm.xlu0 %279, %v246
        %v281 = vpop.permute.xlu0 %280
        %284 = vset.pattern.permute.xlu0 0
        %285 = vperm.xlu0 %284, %v247
        %v286 = vpop.permute.xlu0 %285
        %289 = vset.pattern.permute.xlu0 0
        %290 = vperm.xlu0 %289, %v248
        %v291 = vpop.permute.xlu0 %290
        %294 = vset.pattern.permute.xlu0 0
        %295 = vperm.xlu0 %294, %v249
        %v296 = vpop.permute.xlu0 %295
        %299 = vset.pattern.permute.xlu0 0
        %300 = vperm.xlu0 %299, %v250
        %v301 = vpop.permute.xlu0 %300
        %304 = vset.pattern.permute.xlu0 0
        %305 = vperm.xlu0 %304, %v251
        %v306 = vpop.permute.xlu0 %305
        %309 = vset.pattern.permute.xlu0 0
        %310 = vperm.xlu0 %309, %v252
        %v311 = vpop.permute.xlu0 %310
        %314 = vset.pattern.permute.xlu0 0
        %315 = vperm.xlu0 %314, %v253
        %v316 = vpop.permute.xlu0 %315
        %319 = vset.pattern.permute.xlu0 0
        %320 = vperm.xlu0 %319, %v254
        %v321 = vpop.permute.xlu0 %320
        %324 = vset.pattern.permute.xlu0 0
        %325 = vperm.xlu0 %324, %v255
        %v326 = vpop.permute.xlu0 %325
        %329 = vset.pattern.permute.xlu0 0
        %330 = vperm.xlu0 %329, %v256
        %v331 = vpop.permute.xlu0 %330
        %334 = vset.pattern.permute.xlu0 0
        %335 = vperm.xlu0 %334, %v257
        %v336 = vpop.permute.xlu0 %335
        %v354 = vunpack.c.l.b16 %v210
        %v355 = vunpack.c.l.b16 %v211
        %v356 = vunpack.c.l.b16 %v212
        %v357 = vunpack.c.l.b16 %v213
        %v358 = vunpack.c.l.b16 %v214
        %v359 = vunpack.c.l.b16 %v215
        %v360 = vunpack.c.l.b16 %v216
        %v361 = vunpack.c.l.b16 %v217
        %v362 = vunpack.c.l.b16 %v218
        %v363 = vunpack.c.l.b16 %v219
        %v364 = vunpack.c.l.b16 %v220
        %v365 = vunpack.c.l.b16 %v221
        %v366 = vunpack.c.l.b16 %v222
        %v367 = vunpack.c.l.b16 %v223
        %v368 = vunpack.c.l.b16 %v224
        %v369 = vunpack.c.l.b16 %v225
        %v370 = vpack.c.b16 %v355, %v354
        %v371 = vpack.c.b16 %v357, %v356
        %v372 = vpack.c.b16 %v359, %v358
        %v373 = vpack.c.b16 %v361, %v360
        %v374 = vpack.c.b16 %v363, %v362
        %v375 = vpack.c.b16 %v365, %v364
        %v376 = vpack.c.b16 %v367, %v366
        %v377 = vpack.c.b16 %v369, %v368
        %v402 = vunpack.c.l.b16 %v226
        %v403 = vunpack.c.h.b16 %v226
        %v404 = vunpack.c.l.b16 %v227
        %v405 = vunpack.c.h.b16 %v227
        %v406 = vunpack.c.l.b16 %v228
        %v407 = vunpack.c.h.b16 %v228
        %v408 = vunpack.c.l.b16 %v229
        %v409 = vunpack.c.h.b16 %v229
        %v410 = vunpack.c.l.b16 %v230
        %v411 = vunpack.c.h.b16 %v230
        %v412 = vunpack.c.l.b16 %v231
        %v413 = vunpack.c.h.b16 %v231
        %v414 = vunpack.c.l.b16 %v232
        %v415 = vunpack.c.h.b16 %v232
        %v416 = vunpack.c.l.b16 %v233
        %v417 = vunpack.c.h.b16 %v233
        %v418 = vunpack.c.l.b16 %v234
        %v419 = vunpack.c.h.b16 %v234
        %v420 = vunpack.c.l.b16 %v235
        %v421 = vunpack.c.h.b16 %v235
        %v422 = vunpack.c.l.b16 %v236
        %v423 = vunpack.c.h.b16 %v236
        %v424 = vunpack.c.l.b16 %v237
        %v425 = vunpack.c.h.b16 %v237
        %v426 = vunpack.c.l.b16 %v238
        %v427 = vunpack.c.h.b16 %v238
        %v428 = vunpack.c.l.b16 %v239
        %v429 = vunpack.c.h.b16 %v239
        %v430 = vunpack.c.l.b16 %v240
        %v431 = vunpack.c.h.b16 %v240
        %v432 = vunpack.c.l.b16 %v241
        %v433 = vunpack.c.h.b16 %v241
        %v434 = vpack.c.b16 %v404, %v402
        %v435 = vpack.c.b16 %v405, %v403
        %v436 = vpack.c.b16 %v408, %v406
        %v437 = vpack.c.b16 %v409, %v407
        %v438 = vpack.c.b16 %v412, %v410
        %v439 = vpack.c.b16 %v413, %v411
        %v440 = vpack.c.b16 %v416, %v414
        %v441 = vpack.c.b16 %v417, %v415
        %v442 = vpack.c.b16 %v420, %v418
        %v443 = vpack.c.b16 %v421, %v419
        %v444 = vpack.c.b16 %v424, %v422
        %v445 = vpack.c.b16 %v425, %v423
        %v446 = vpack.c.b16 %v428, %v426
        %v447 = vpack.c.b16 %v429, %v427
        %v448 = vpack.c.b16 %v432, %v430
        %v449 = vpack.c.b16 %v433, %v431
        %466 = vmatprep.subr.bf16.mxu0 %v435
        %467 = vmatpush1.bf16.msra.mxu0 %v434
        %468 = vmatprep.subr.bf16.mxu0 %v437
        %469 = vmatpush1.bf16.msra.mxu0 %v436
        %470 = vmatprep.subr.bf16.mxu0 %v439
        %471 = vmatpush1.bf16.msra.mxu0 %v438
        %472 = vmatprep.subr.bf16.mxu0 %v441
        %473 = vmatpush1.bf16.msra.mxu0 %v440
        %474 = vmatprep.subr.bf16.mxu0 %v443
        %475 = vmatpush1.bf16.msra.mxu0 %v442
        %476 = vmatprep.subr.bf16.mxu0 %v445
        %477 = vmatpush1.bf16.msra.mxu0 %v444
        %478 = vmatprep.subr.bf16.mxu0 %v447
        %479 = vmatpush1.bf16.msra.mxu0 %v446
        %480 = vmatprep.subr.bf16.mxu0 %v449
        %481 = vmatpush1.bf16.msra.mxu0 %v448
        %482 = vmatprep.subr.bf16.mxu0 0
        %483 = vmatpush1.bf16.msra.mxu0 0
        %484 = vmatprep.subr.bf16.mxu0 0
        %485 = vmatpush1.bf16.msra.mxu0 0
        %486 = vmatprep.subr.bf16.mxu0 0
        %487 = vmatpush1.bf16.msra.mxu0 0
        %488 = vmatprep.subr.bf16.mxu0 0
        %489 = vmatpush1.bf16.msra.mxu0 0
        %490 = vmatprep.subr.bf16.mxu0 0
        %491 = vmatpush1.bf16.msra.mxu0 0
        %492 = vmatprep.subr.bf16.mxu0 0
        %493 = vmatpush1.bf16.msra.mxu0 0
        %494 = vmatprep.subr.bf16.mxu0 0
        %495 = vmatpush1.bf16.msra.mxu0 0
        %496 = vmatprep.subr.bf16.mxu0 0
        %497 = vmatpush1.bf16.msra.mxu0 0
        %498 = vmatprep.mubr.bf16.mxu0 0
        %499 = vmatmul.mubr.bf16.gmra.mrb[0].mxu0 %v370
        %v500 = vpop.f32.mrb[0].mxu0
        %v501 = vadd.f32 %v261, %v500
        %v502 = vpop.f32.mrb[0].mxu0
        %v503 = vadd.f32 %v261, %v502
        %v504 = vpop.f32.mrb[0].mxu0
        %v505 = vadd.f32 %v266, %v504
        %v506 = vpop.f32.mrb[0].mxu0
        %v507 = vadd.f32 %v266, %v506
        %508 = vmatprep.mubr.bf16.mxu0 0
        %509 = vmatmul.mubr.bf16.gmra.mrb[0].mxu0 %v371
        %v510 = vpop.f32.mrb[0].mxu0
        %v511 = vadd.f32 %v271, %v510
        %v512 = vpop.f32.mrb[0].mxu0
        %v513 = vadd.f32 %v271, %v512
        %v514 = vpop.f32.mrb[0].mxu0
        %v515 = vadd.f32 %v276, %v514
        %v516 = vpop.f32.mrb[0].mxu0
        %v517 = vadd.f32 %v276, %v516
        %518 = vmatprep.mubr.bf16.mxu0 0
        %519 = vmatmul.mubr.bf16.gmra.mrb[0].mxu0 %v372
        %v520 = vpop.f32.mrb[0].mxu0
        %v521 = vadd.f32 %v281, %v520
        %v522 = vpop.f32.mrb[0].mxu0
        %v523 = vadd.f32 %v281, %v522
        %v524 = vpop.f32.mrb[0].mxu0
        %v525 = vadd.f32 %v286, %v524
        %v526 = vpop.f32.mrb[0].mxu0
        %v527 = vadd.f32 %v286, %v526
        %528 = vmatprep.mubr.bf16.mxu0 0
        %529 = vmatmul.mubr.bf16.gmra.mrb[0].mxu0 %v373
        %v530 = vpop.f32.mrb[0].mxu0
        %v531 = vadd.f32 %v291, %v530
        %v532 = vpop.f32.mrb[0].mxu0
        %v533 = vadd.f32 %v291, %v532
        %v534 = vpop.f32.mrb[0].mxu0
        %v535 = vadd.f32 %v296, %v534
        %v536 = vpop.f32.mrb[0].mxu0
        %v537 = vadd.f32 %v296, %v536
        %538 = vmatprep.mubr.bf16.mxu0 0
        %539 = vmatmul.mubr.bf16.gmra.mrb[0].mxu0 %v374
        %v540 = vpop.f32.mrb[0].mxu0
        %v541 = vadd.f32 %v301, %v540
        %v542 = vpop.f32.mrb[0].mxu0
        %v543 = vadd.f32 %v301, %v542
        %v544 = vpop.f32.mrb[0].mxu0
        %v545 = vadd.f32 %v306, %v544
        %v546 = vpop.f32.mrb[0].mxu0
        %v547 = vadd.f32 %v306, %v546
        %548 = vmatprep.mubr.bf16.mxu0 0
        %549 = vmatmul.mubr.bf16.gmra.mrb[0].mxu0 %v375
        %v550 = vpop.f32.mrb[0].mxu0
        %v551 = vadd.f32 %v311, %v550
        %v552 = vpop.f32.mrb[0].mxu0
        %v553 = vadd.f32 %v311, %v552
        %v554 = vpop.f32.mrb[0].mxu0
        %v555 = vadd.f32 %v316, %v554
        %v556 = vpop.f32.mrb[0].mxu0
        %v557 = vadd.f32 %v316, %v556
        %558 = vmatprep.mubr.bf16.mxu0 0
        %559 = vmatmul.mubr.bf16.gmra.mrb[0].mxu0 %v376
        %v560 = vpop.f32.mrb[0].mxu0
        %v561 = vadd.f32 %v321, %v560
        %v562 = vpop.f32.mrb[0].mxu0
        %v563 = vadd.f32 %v321, %v562
        %v564 = vpop.f32.mrb[0].mxu0
        %v565 = vadd.f32 %v326, %v564
        %v566 = vpop.f32.mrb[0].mxu0
        %v567 = vadd.f32 %v326, %v566
        %568 = vmatprep.mubr.bf16.mxu0 0
        %569 = vmatmul.mubr.bf16.gmra.mrb[0].mxu0 %v377
        %v570 = vpop.f32.mrb[0].mxu0
        %v571 = vadd.f32 %v331, %v570
        %v572 = vpop.f32.mrb[0].mxu0
        %v573 = vadd.f32 %v331, %v572
        %v574 = vpop.f32.mrb[0].mxu0
        %v575 = vadd.f32 %v336, %v574
        %v576 = vpop.f32.mrb[0].mxu0
        %v577 = vadd.f32 %v336, %v576
        %578 = vdwg.mxu0
        %v579 = vpack.c.bf16 %v505, %v501
        %v580 = vpack.c.bf16 %v507, %v503
        %v581 = vpack.c.bf16 %v515, %v511
        %v582 = vpack.c.bf16 %v517, %v513
        %v583 = vpack.c.bf16 %v525, %v521
        %v584 = vpack.c.bf16 %v527, %v523
        %v585 = vpack.c.bf16 %v535, %v531
        %v586 = vpack.c.bf16 %v537, %v533
        %v587 = vpack.c.bf16 %v545, %v541
        %v588 = vpack.c.bf16 %v547, %v543
        %v589 = vpack.c.bf16 %v555, %v551
        %v590 = vpack.c.bf16 %v557, %v553
        %v591 = vpack.c.bf16 %v565, %v561
        %v592 = vpack.c.bf16 %v567, %v563
        %v593 = vpack.c.bf16 %v575, %v571
        %v594 = vpack.c.bf16 %v577, %v573
        %v611 = vunpack.c.l.b16 %v579
        %v612 = vunpack.c.l.b16 %v580
        %v613 = vunpack.c.h.b16 %v579
        %v614 = vunpack.c.h.b16 %v580
        %v615 = vunpack.c.l.b16 %v581
        %v616 = vunpack.c.l.b16 %v582
        %v617 = vunpack.c.h.b16 %v581
        %v618 = vunpack.c.h.b16 %v582
        %v619 = vunpack.c.l.b16 %v583
        %v620 = vunpack.c.l.b16 %v584
        %v621 = vunpack.c.h.b16 %v583
        %v622 = vunpack.c.h.b16 %v584
        %v623 = vunpack.c.l.b16 %v585
        %v624 = vunpack.c.l.b16 %v586
        %v625 = vunpack.c.h.b16 %v585
        %v626 = vunpack.c.h.b16 %v586
        %v627 = vunpack.c.l.b16 %v587
        %v628 = vunpack.c.l.b16 %v588
        %v629 = vunpack.c.h.b16 %v587
        %v630 = vunpack.c.h.b16 %v588
        %v631 = vunpack.c.l.b16 %v589
        %v632 = vunpack.c.l.b16 %v590
        %v633 = vunpack.c.h.b16 %v589
        %v634 = vunpack.c.h.b16 %v590
        %v635 = vunpack.c.l.b16 %v591
        %v636 = vunpack.c.l.b16 %v592
        %v637 = vunpack.c.h.b16 %v591
        %v638 = vunpack.c.h.b16 %v592
        %v639 = vunpack.c.l.b16 %v593
        %v640 = vunpack.c.l.b16 %v594
        %v641 = vunpack.c.h.b16 %v593
        %v642 = vunpack.c.h.b16 %v594
        %v643 = vpack.c.b16 %v612, %v611
        %v644 = vpack.c.b16 %v614, %v613
        %v645 = vpack.c.b16 %v616, %v615
        %v646 = vpack.c.b16 %v618, %v617
        %v647 = vpack.c.b16 %v620, %v619
        %v648 = vpack.c.b16 %v622, %v621
        %v649 = vpack.c.b16 %v624, %v623
        %v650 = vpack.c.b16 %v626, %v625
        %v651 = vpack.c.b16 %v628, %v627
        %v652 = vpack.c.b16 %v630, %v629
        %v653 = vpack.c.b16 %v632, %v631
        %v654 = vpack.c.b16 %v634, %v633
        %v655 = vpack.c.b16 %v636, %v635
        %v656 = vpack.c.b16 %v638, %v637
        %v657 = vpack.c.b16 %v640, %v639
        %v658 = vpack.c.b16 %v642, %v641
        %675 = vst [vmem:[%s206] sm:$0xff] %v643
        %676 = vst [vmem:[%s206 + $0x8] sm:$0xff] %v644
        %677 = vst [vmem:[%s206 + $0x10] sm:$0xff] %v645
        %678 = vst [vmem:[%s206 + $0x18] sm:$0xff] %v646
        %679 = vst [vmem:[%s206 + $0x20] sm:$0xff] %v647
        %680 = vst [vmem:[%s206 + $0x28] sm:$0xff] %v648
        %681 = vst [vmem:[%s206 + $0x30] sm:$0xff] %v649
        %682 = vst [vmem:[%s206 + $0x38] sm:$0xff] %v650
        %683 = vst [vmem:[%s206 + $0x40] sm:$0xff] %v651
        %684 = vst [vmem:[%s206 + $0x48] sm:$0xff] %v652
        %685 = vst [vmem:[%s206 + $0x50] sm:$0xff] %v653
        %686 = vst [vmem:[%s206 + $0x58] sm:$0xff] %v654
        %687 = vst [vmem:[%s206 + $0x60] sm:$0xff] %v655
        %688 = vst [vmem:[%s206 + $0x68] sm:$0xff] %v656
        %689 = vst [vmem:[%s206 + $0x70] sm:$0xff] %v657
        %690 = vst [vmem:[%s206 + $0x78] sm:$0xff] %v658
        %s691 = sand.u32 %s112, 1
        %s692 = scalar_lea.sflag [#allocation4], %s691
        %s693 = sand.u32 %s112, 1
        %s694 = smul.addr %s693, 128
        %s695 = scalar_lea.vmem [#allocation5], %s694
        // Predicated region
        $region37: #{_conv1x1_nchw.1} parent=31 // pred_check
          %p696 = pneg %p122
        $region38: #{_conv1x1_nchw.1} parent=31 // pred_check_branch
          %698 = sbr.rel (%p696) target = $region40
        $region39: #{_conv1x1_nchw.1} parent=31 // pred_region
          %s699 = smul.u32 2, %s25
          %s701 = ssub.s32 2048, 2048
          %702 = vsyncadd %s692, %s701
          %s703 = smul.addr %s24, 32
          %s704 = sadd.s32 %s699, %s703
          %s705 = smul.addr %s704, 64
          %s706 = scalar_lea.hbm %s3, %s705
          %s707 = sshll.u32 %s695, 4
          %s708 = int_to_ptr.vmem [resolvable:$true] %s707
          %713 = dma.vmem_to_hbm [thread:$0]  %s708, 2048, %s706, %s692, 128, 128, 8
        $region40: #{_conv1x1_nchw.1} parent=31 // pred_fallthru
          _
      $region32: #{_conv1x1_nchw.1} parent=5 // pred_fallthru
        _
      %p714 = scmp.le.s32.totalorder 2, %s15
      // Predicated region
      $region41: #{_conv1x1_nchw.1} parent=5 // pred_check
        %p715 = pneg %p714
      $region42: #{_conv1x1_nchw.1} parent=5 // pred_check_branch
        %717 = sbr.rel (%p715) target = $region44
      $region43: #{_conv1x1_nchw.1} parent=5 // pred_region
        %s718 = ssub.s32 %s15, 2
        // Predicated region
        $region45: #{_conv1x1_nchw.1} parent=43 // pred_check
          %p719 = pneg %p128
        $region46: #{_conv1x1_nchw.1} parent=43 // pred_check_branch
          %721 = sbr.rel (%p719) target = $region48
        $region47: #{_conv1x1_nchw.1} parent=43 // pred_region
          %s722 = sand.u32 %s113, 1
          %s723 = scalar_lea.sflag [#allocation4], %s722
          %s724 = sand.u32 %s113, 1
          %s725 = smul.addr %s724, 128
          %s726 = scalar_lea.vmem [#allocation5], %s725
          %727 = dma.done %s723, 2048
        $region48: #{_conv1x1_nchw.1} parent=43 // pred_fallthru
          _
      $region44: #{_conv1x1_nchw.1} parent=5 // pred_fallthru
        _
    $region6: #{_conv1x1_nchw.1} parent=1 // loop_footer
      %s19 = sadd.s32 1, %s15
    $region7: #{_conv1x1_nchw.1} parent=1 // loop_footer_branch
      %14 = sbr.rel target = $region3
    $region8: #{_conv1x1_nchw.1} parent=1 // loop_exit
      _
    %728 = vsyncpa [#allocation3], 1
    %s729 = scalar_lea.sflag [#allocation3], 1
    %730 = vsyncpa %s729, 1
    %731 = vsyncpa [#allocation4], 1
    %s732 = scalar_lea.sflag [#allocation4], 1
    %733 = vsyncpa %s732, 1

</llo_original>
